<compile_context>
chip_gen: v6e
topology: v6e:2x2x1
jax: 0.10.0
libtpu: 0.0.40
codegen_flags: <defaults>
</compile_context>

<pallas_src>
import functools

import jax
import jax.numpy as jnp
from jax.experimental import pallas as pl
from jax.experimental.pallas import tpu as pltpu

BN_EPS = 1e-5  # torch.nn.BatchNorm1d default
IN_F = 8
HID_F = 8
OUT_F = 1


# ---------------------------------------------------------------------------
# Fused whole-batch kernel (no grid): everything VMEM-resident, lane = batch.
# ---------------------------------------------------------------------------
def _fused_kernel(xT_ref, w1_ref, b1_ref, w2_ref, b2_ref, oT_ref):
    xT = xT_ref[...]                                              # (8, B)
    w1 = w1_ref[...]                                              # (8, 8) (out, in)

    # fc1: hT[i, b] = sum_k W1[i, k] * xT[k, b] + b1[i]
    h = jnp.dot(w1, xT, preferred_element_type=jnp.float32) + b1_ref[...]   # (8, B)

    # BatchNorm1d(affine=False, track_running_stats=False): biased batch stats.
    # Two-pass (mean, then centered variance) for precision parity with torch.
    mean = jnp.mean(h, axis=1, keepdims=True)                     # (8, 1)
    var = jnp.mean(jnp.square(h - mean), axis=1, keepdims=True)   # (8, 1)
    h = (h - mean) * jax.lax.rsqrt(var + BN_EPS)

    # relu
    h = jnp.maximum(h, 0.0)

    # fc2: K=8 is far too skinny for the MXU -> broadcast MAC + sublane reduce.
    y = jnp.sum(h * w2_ref[...], axis=0, keepdims=True) + b2_ref[0, 0]      # (1, B)
    oT_ref[...] = jax.nn.sigmoid(y).astype(oT_ref.dtype)


# ---------------------------------------------------------------------------
# Batch-tiled kernel: grid = (pass, batch_tile).
#   pass 0: accumulate global sum / sum-of-squares of fc1 activations
#   pass 1: normalize with the global stats, relu, fc2, sigmoid, store output
# BN statistics stay global over the whole batch (correctness requirement).
# ---------------------------------------------------------------------------
def _make_tiled_kernel(total_batch):
    inv_b = 1.0 / float(total_batch)

    def kernel(xT_ref, w1_ref, b1_ref, w2_ref, b2_ref, oT_ref, sum_ref, ssq_ref):
        p = pl.program_id(0)   # 0 = stats pass, 1 = output pass
        t = pl.program_id(1)   # batch tile index

        # fc1 for this tile (recomputed in both passes: same HBM bytes as
        # spilling/re-reading h, and the tiny matmul is negligible).
        h = (jnp.dot(w1_ref[...], xT_ref[...], preferred_element_type=jnp.float32)
             + b1_ref[...])                                        # (8, TB)

        @pl.when((p == 0) & (t == 0))
        def _():
            sum_ref[...] = jnp.zeros_like(sum_ref)
            ssq_ref[...] = jnp.zeros_like(ssq_ref)

        @pl.when(p == 0)
        def _():
            sum_ref[...] += jnp.sum(h, axis=1, keepdims=True)
            ssq_ref[...] += jnp.sum(h * h, axis=1, keepdims=True)
            # Output block is written back every grid step; keep pass-0 defined.
            oT_ref[...] = jnp.zeros_like(oT_ref)

        @pl.when(p == 1)
        def _():
            mean = sum_ref[...] * inv_b                                      # (8, 1)
            # TODO(synk): one-pass E[x^2]-E[x]^2 loses precision if |mean|>>std;
            # add a third (centered) stats pass if fc1 activations grow large.
            var = jnp.maximum(ssq_ref[...] * inv_b - mean * mean, 0.0)       # (8, 1)
            hn = jnp.maximum((h - mean) * jax.lax.rsqrt(var + BN_EPS), 0.0)
            y = jnp.sum(hn * w2_ref[...], axis=0, keepdims=True) + b2_ref[0, 0]
            oT_ref[...] = jax.nn.sigmoid(y).astype(oT_ref.dtype)

    return kernel


# ---------------------------------------------------------------------------
# Wrapper
# ---------------------------------------------------------------------------
def forward_pallas(x, params, batch_tile=None):
    """x: (B, 8) float32 -> (B, 1) float32."""
    batch = x.shape[0]
    xT = x.T                                                       # (8, B): batch on lanes
    w1, b1, w2, b2 = params["w1"], params["b1"], params["w2"], params["b2"]

    vmem = pl.BlockSpec(memory_space=pltpu.MemorySpace.VMEM)
    smem = pl.BlockSpec(memory_space=pltpu.MemorySpace.SMEM)

    if batch_tile is None or batch_tile >= batch:
        # Single fused call, whole arrays VMEM-resident (tiny shapes; this is
        # the launch-latency-bound regime).
        yT = pl.pallas_call(
            _fused_kernel,
            out_shape=jax.ShapeDtypeStruct((OUT_F, batch), jnp.float32),
            in_specs=[vmem, vmem, vmem, vmem, smem],
            out_specs=vmem,
        )(xT, w1, b1, w2, b2)
    else:
        if batch % batch_tile != 0 or batch_tile % 128 != 0:
            raise ValueError("batch_tile must divide batch and be a multiple of 128")
        n_tiles = batch // batch_tile
        grid_spec = pltpu.PrefetchScalarGridSpec(
            num_scalar_prefetch=0,
            grid=(2, n_tiles),  # (pass, batch tile)
            in_specs=[
                pl.BlockSpec((HID_F, batch_tile), lambda p, t: (0, t)),  # xT tile
                pl.BlockSpec((HID_F, IN_F), lambda p, t: (0, 0)),        # w1 (out, in)
                pl.BlockSpec((HID_F, 1), lambda p, t: (0, 0)),           # b1 column
                pl.BlockSpec((HID_F, 1), lambda p, t: (0, 0)),           # w2 column
                smem,                                                    # b2 scalar
            ],
            out_specs=pl.BlockSpec((OUT_F, batch_tile), lambda p, t: (0, t)),
            scratch_shapes=[pltpu.VMEM((HID_F, 1), jnp.float32),
                            pltpu.VMEM((HID_F, 1), jnp.float32)],
        )
        yT = pl.pallas_call(
            _make_tiled_kernel(batch),
            out_shape=jax.ShapeDtypeStruct((OUT_F, batch), jnp.float32),
            grid_spec=grid_spec,
            # Both axes sequential: the stats pass accumulates into shared
            # scratch, so the tile axis must NOT be sharded across cores.
            compiler_params=pltpu.CompilerParams(
                dimension_semantics=("arbitrary", "arbitrary")),
        )(xT, w1, b1, w2, b2)

    return yT.reshape(batch, OUT_F)


# ---------------------------------------------------------------------------
# Parameter init (matches nn.Linear(8,8) / nn.Linear(8,1) shapes & init bounds)
#   w1: (out, in) = (8, 8)   -- native PyTorch orientation (used as W1 @ xT)
#   b1: (8, 1) column
#   w2: (8, 1) column        -- fc2 weight transposed
#   b2: (1, 1) scalar (SMEM)
# ---------------------------------------------------------------------------
def init_params(key):
    k1w, k1b, k2w, k2b = jax.random.split(key, 4)
    bound1 = 1.0 / jnp.sqrt(IN_F)
    w1 = jax.random.uniform(k1w, (HID_F, IN_F), jnp.float32, -bound1, bound1)
    b1 = jax.random.uniform(k1b, (HID_F, 1), jnp.float32, -bound1, bound1)
    bound2 = 1.0 / jnp.sqrt(HID_F)
    w2 = jax.random.uniform(k2w, (HID_F, 1), jnp.float32, -bound2, bound2)
    b2 = jax.random.uniform(k2b, (1, 1), jnp.float32, -bound2, bound2)
    return {"w1": w1, "b1": b1, "w2": w2, "b2": b2}


# ---------------------------------------------------------------------------
# Pure-JAX reference mirroring the PyTorch forward
# ---------------------------------------------------------------------------
def forward_ref(x, params):
    h = x @ params["w1"].T + params["b1"].T
    mean = jnp.mean(h, axis=0, keepdims=True)
    var = jnp.mean((h - mean) ** 2, axis=0, keepdims=True)
    h = (h - mean) * jax.lax.rsqrt(var + BN_EPS)
    h = jnp.maximum(h, 0.0)
    y = h @ params["w2"] + params["b2"]
    return jax.nn.sigmoid(y)


# ---------------------------------------------------------------------------
if __name__ == "__main__":
    key = jax.random.PRNGKey(0)
    key, kp = jax.random.split(key)
    params = init_params(kp)

    fwd_fused = jax.jit(forward_pallas)
    fwd_tiled = jax.jit(functools.partial(forward_pallas, batch_tile=256))

    # 1) Small and lane-dense batches through the fused whole-array path.
    for batch in (8, 128):
        key, kx = jax.random.split(key)
        x = jax.random.normal(kx, (batch, IN_F), jnp.float32)
        out = jax.block_until_ready(fwd_fused(x, params))
        ref = forward_ref(x, params)
        assert out.shape == (batch, OUT_F)
        assert jnp.allclose(out, ref, atol=1e-5, rtol=1e-5), f"mismatch (fused, B={batch})"

    # 2) Larger batch through the two-pass batch-tiled (pipelined) path;
    #    BN statistics remain global over the whole batch.
    key, kx = jax.random.split(key)
    x = jax.random.normal(kx, (1024, IN_F), jnp.float32)
    out = jax.block_until_ready(fwd_tiled(x, params))
    ref = forward_ref(x, params)
    assert out.shape == (1024, OUT_F)
    assert jnp.allclose(out, ref, atol=1e-5, rtol=1e-5), "mismatch (tiled, B=1024)"

    print("KERNEL_OK")
</pallas_src>

<mosaic_0001>
module attributes {stable_mosaic.version = 11 : i64} {
  func.func @_fused_kernel(%arg0: memref<8x8xf32, #tpu.memory_space<vmem>>, %arg1: memref<8x8xf32, #tpu.memory_space<vmem>>, %arg2: memref<8x1xf32, #tpu.memory_space<vmem>>, %arg3: memref<8x1xf32, #tpu.memory_space<vmem>>, %arg4: memref<1x1xf32, #tpu.memory_space<smem>>, %arg5: memref<1x8xf32, #tpu.memory_space<vmem>>) attributes {dimension_semantics = [], scalar_prefetch = 0 : i64, scratch_operands = 0 : i64, tpu.core_type = #tpu.core_type<tc>} {
    %c0 = arith.constant 0 : index
    %c0_0 = arith.constant 0 : index
    %0 = vector.load %arg0[%c0, %c0_0] : memref<8x8xf32, #tpu.memory_space<vmem>>, vector<8x8xf32>
    %c0_1 = arith.constant 0 : index
    %c0_2 = arith.constant 0 : index
    %1 = vector.load %arg1[%c0_1, %c0_2] : memref<8x8xf32, #tpu.memory_space<vmem>>, vector<8x8xf32>
    %cst = arith.constant dense<0.000000e+00> : vector<8x8xf32>
    %2 = tpu.matmul %1, %0, %cst {dimension_numbers = #tpu.dot_dimension_numbers<[1], [0], [0], [1], [0, 0, 1, 1], [], []>} : vector<8x8xf32>, vector<8x8xf32>, vector<8x8xf32> -> vector<8x8xf32>
    %c0_3 = arith.constant 0 : index
    %c0_4 = arith.constant 0 : index
    %3 = vector.load %arg2[%c0_3, %c0_4] : memref<8x1xf32, #tpu.memory_space<vmem>>, vector<8x1xf32>
    %4 = vector.broadcast %3 : vector<8x1xf32> to vector<8x8xf32>
    %5 = arith.addf %2, %4 : vector<8x8xf32>
    %cst_5 = arith.constant dense<0.000000e+00> : vector<8xf32>
    %6 = vector.multi_reduction <add>, %5, %cst_5 [1] : vector<8x8xf32> to vector<8xf32>
    %7 = vector.shape_cast %6 : vector<8xf32> to vector<8x1xf32>
    %cst_6 = arith.constant 8.000000e+00 : f32
    %8 = vector.broadcast %cst_6 : f32 to vector<8x1xf32>
    %9 = arith.divf %7, %8 : vector<8x1xf32>
    %10 = vector.broadcast %9 : vector<8x1xf32> to vector<8x8xf32>
    %11 = arith.subf %5, %10 : vector<8x8xf32>
    %12 = arith.mulf %11, %11 : vector<8x8xf32>
    %cst_7 = arith.constant dense<0.000000e+00> : vector<8xf32>
    %13 = vector.multi_reduction <add>, %12, %cst_7 [1] : vector<8x8xf32> to vector<8xf32>
    %14 = vector.shape_cast %13 : vector<8xf32> to vector<8x1xf32>
    %cst_8 = arith.constant 8.000000e+00 : f32
    %15 = vector.broadcast %cst_8 : f32 to vector<8x1xf32>
    %16 = arith.divf %14, %15 : vector<8x1xf32>
    %17 = vector.broadcast %9 : vector<8x1xf32> to vector<8x8xf32>
    %18 = arith.subf %5, %17 : vector<8x8xf32>
    %cst_9 = arith.constant 9.99999974E-6 : f32
    %19 = vector.broadcast %cst_9 : f32 to vector<8x1xf32>
    %20 = arith.addf %16, %19 : vector<8x1xf32>
    %21 = math.rsqrt %20 : vector<8x1xf32>
    %22 = vector.broadcast %21 : vector<8x1xf32> to vector<8x8xf32>
    %23 = arith.mulf %18, %22 : vector<8x8xf32>
    %cst_10 = arith.constant 0.000000e+00 : f32
    %24 = vector.broadcast %cst_10 : f32 to vector<8x8xf32>
    %25 = arith.maximumf %23, %24 : vector<8x8xf32>
    %c0_11 = arith.constant 0 : index
    %c0_12 = arith.constant 0 : index
    %26 = vector.load %arg3[%c0_11, %c0_12] : memref<8x1xf32, #tpu.memory_space<vmem>>, vector<8x1xf32>
    %27 = vector.broadcast %26 : vector<8x1xf32> to vector<8x8xf32>
    %28 = arith.mulf %25, %27 : vector<8x8xf32>
    %cst_13 = arith.constant dense<0.000000e+00> : vector<8xf32>
    %29 = vector.multi_reduction <add>, %28, %cst_13 [0] : vector<8x8xf32> to vector<8xf32>
    %30 = vector.shape_cast %29 : vector<8xf32> to vector<1x8xf32>
    %c0_14 = arith.constant 0 : index
    %c0_15 = arith.constant 0 : index
    %31 = memref.load %arg4[%c0_14, %c0_15] : memref<1x1xf32, #tpu.memory_space<smem>>
    %32 = vector.broadcast %31 : f32 to vector<1x8xf32>
    %33 = arith.addf %30, %32 : vector<1x8xf32>
    %34 = arith.negf %33 : vector<1x8xf32>
    %35 = math.exp %34 : vector<1x8xf32>
    %cst_16 = arith.constant 1.000000e+00 : f32
    %36 = vector.broadcast %cst_16 : f32 to vector<1x8xf32>
    %37 = arith.addf %36, %35 : vector<1x8xf32>
    %38 = arith.divf %36, %37 : vector<1x8xf32>
    %c0_17 = arith.constant 0 : index
    %c0_18 = arith.constant 0 : index
    %39 = vector.load %arg5[%c0_17, %c0_18] : memref<1x8xf32, #tpu.memory_space<vmem>>, vector<1x8xf32>
    tpu.vector_store %arg5[%c0_17, %c0_18], %38 {strides = array<i32>} : memref<1x8xf32, #tpu.memory_space<vmem>>, vector<1x8xf32>,
    return
  }
}

</mosaic_0001>

<llo_original>
// kernel: forward_pallas.1
$region0: #{forward_pallas.1}
  #allocation0 [shape = 'u32[]', space=smem, size = 0x4, offset = 0x4, fixed_abs, tag = 'smem constant byte address 0x4 - core index']
  #allocation1 [shape = 'u32[144,128]{1,0:T(1,128)}', space=vmem, size = 0x12000, scoped, tag = 'internal scratch']
  #allocation2 [shape = 'f32[1,1]{1,0:T(1,128)S(6)}', space=smem, size = 0x200, scoped, tag = 'scoped memory for forward_pallas.1']
  %s0 = inlined_call_operand.vmem [shape: f32[8,8], index: 0, kind: input, shape index: {}]
  %s1 = inlined_call_operand.vmem [shape: f32[8,8], index: 1, kind: input, shape index: {}]
  %s2 = inlined_call_operand.vmem [shape: f32[8,1], index: 2, kind: input, shape index: {}]
  %s3 = inlined_call_operand.vmem [shape: f32[8,1], index: 3, kind: input, shape index: {}]
  %s4 = inlined_call_operand.<no memory space> [shape: f32[1,1], index: 4, kind: input, shape index: {}]
  %s5 = inlined_call_operand.hbm [shape: f32[1,8], index: 5, kind: output, shape index: {}]
  %s6 = sld [smem:[#allocation0]]
  $region30: #{forward_pallas.1} parent=0
    _
  %s8 = ssub.s32 1, %s6
  %s9 = scalar_select 0, %s8, %s6
  %10 = sst [smem:[#allocation2]] %s4
  $region1: #{forward_pallas.1} parent=0
    #allocation3 [shape = 'u8[512]{0}', space=vmem, size = 0x400, scoped, tag = 'output window, operand 0, single buffered']
    #allocation4 [shape = 's32[1]{0}', space=sflag, size = 0x4, scoped, tag = 'scoped memory for forward_pallas.1']
    %11 = vsyncpa [#allocation4], 0
    // Predicated region
    $region2: #{forward_pallas.1} parent=1 // pred_check
      _
    $region3: #{forward_pallas.1} parent=1 // pred_check_branch
      %13 = sbr.rel (0) target = $region5
    $region4: #{forward_pallas.1} parent=1 // pred_region
      _
    $region5: #{forward_pallas.1} parent=1 // pred_fallthru
      _
    // Predicated region
    $region6: #{forward_pallas.1} parent=1 // pred_check
      _
    $region7: #{forward_pallas.1} parent=1 // pred_check_branch
      %15 = sbr.rel (0) target = $region9
    $region8: #{forward_pallas.1} parent=1 // pred_region
      _
    $region9: #{forward_pallas.1} parent=1 // pred_fallthru
      _
    // Predicated region
    $region10: #{forward_pallas.1} parent=1 // pred_check
      _
    $region11: #{forward_pallas.1} parent=1 // pred_check_branch
      %17 = sbr.rel (0) target = $region13
    $region12: #{forward_pallas.1} parent=1 // pred_region
      _
    $region13: #{forward_pallas.1} parent=1 // pred_fallthru
      _
    // Predicated region
    $region14: #{forward_pallas.1} parent=1 // pred_check
      _
    $region15: #{forward_pallas.1} parent=1 // pred_check_branch
      %19 = sbr.rel (0) target = $region17
    $region16: #{forward_pallas.1} parent=1 // pred_region
      _
    $region17: #{forward_pallas.1} parent=1 // pred_fallthru
      _
    // Predicated region
    $region18: #{forward_pallas.1} parent=1 // pred_check
      _
    $region19: #{forward_pallas.1} parent=1 // pred_check_branch
      %21 = sbr.rel (0) target = $region21
    $region20: #{forward_pallas.1} parent=1 // pred_region
      _
    $region21: #{forward_pallas.1} parent=1 // pred_fallthru
      _
    %v22 = vld [vmem:[%s0] sm:$0xff]
    %v23 = vld [vmem:[%s1] sm:$0xff]
    %v24 = vld [vmem:[%s2] sm:$0xff]
    %26 = vset.pattern.permute.xlu0 0
    %27 = vperm.xlu0 %26, %v24
    %v28 = vpop.permute.xlu0 %27
    %vm30 = vcmask 64512
    %v32 = vsel %vm30, %v23, 0
    %34 = vmatprep.subr.mxu0 0.0
    %35 = vmatpush1.msra.mxu0 0.0
    %36 = vmatprep.subr.mxu0 0.0
    %37 = vmatpush1.msra.mxu0 0.0
    %38 = vmatprep.subr.mxu0 0.0
    %39 = vmatpush1.msra.mxu0 0.0
    %40 = vmatprep.subr.mxu0 0.0
    %41 = vmatpush1.msra.mxu0 0.0
    %42 = vmatprep.subr.mxu0 0.0
    %43 = vmatpush1.msra.mxu0 0.0
    %44 = vmatprep.subr.mxu0 0.0
    %45 = vmatpush1.msra.mxu0 0.0
    %46 = vmatprep.subr.mxu0 0.0
    %47 = vmatpush1.msra.mxu0 0.0
    %48 = vmatprep.subr.mxu0 0.0
    %49 = vmatpush1.msra.mxu0 0.0
    %50 = vmatprep.subr.mxu0 0.0
    %51 = vmatpush1.msra.mxu0 0.0
    %52 = vmatprep.subr.mxu0 0.0
    %53 = vmatpush1.msra.mxu0 0.0
    %54 = vmatprep.subr.mxu0 0.0
    %55 = vmatpush1.msra.mxu0 0.0
    %56 = vmatprep.subr.mxu0 0.0
    %57 = vmatpush1.msra.mxu0 0.0
    %58 = vmatprep.subr.mxu0 0.0
    %59 = vmatpush1.msra.mxu0 0.0
    %60 = vmatprep.subr.mxu0 0.0
    %61 = vmatpush1.msra.mxu0 0.0
    %62 = vmatprep.subr.mxu0 0.0
    %63 = vmatpush1.msra.mxu0 0.0
    %64 = vmatprep.subr.mxu0 0.0
    %65 = vmatpush1.msra.mxu0 %v22
    %66 = vmatprep.subr.mxu0 0.0
    %67 = vmatpush2.msra.mxu0 0.0
    %68 = vmatprep.subr.mxu0 0.0
    %69 = vmatpush2.msra.mxu0 0.0
    %70 = vmatprep.subr.mxu0 0.0
    %71 = vmatpush2.msra.mxu0 0.0
    %72 = vmatprep.subr.mxu0 0.0
    %73 = vmatpush2.msra.mxu0 0.0
    %74 = vmatprep.subr.mxu0 0.0
    %75 = vmatpush2.msra.mxu0 0.0
    %76 = vmatprep.subr.mxu0 0.0
    %77 = vmatpush2.msra.mxu0 0.0
    %78 = vmatprep.subr.mxu0 0.0
    %79 = vmatpush2.msra.mxu0 0.0
    %80 = vmatprep.subr.mxu0 0.0
    %81 = vmatpush2.msra.mxu0 0.0
    %82 = vmatprep.subr.mxu0 0.0
    %83 = vmatpush2.msra.mxu0 0.0
    %84 = vmatprep.subr.mxu0 0.0
    %85 = vmatpush2.msra.mxu0 0.0
    %86 = vmatprep.subr.mxu0 0.0
    %87 = vmatpush2.msra.mxu0 0.0
    %88 = vmatprep.subr.mxu0 0.0
    %89 = vmatpush2.msra.mxu0 0.0
    %90 = vmatprep.subr.mxu0 0.0
    %91 = vmatpush2.msra.mxu0 0.0
    %92 = vmatprep.subr.mxu0 0.0
    %93 = vmatpush2.msra.mxu0 0.0
    %94 = vmatprep.subr.mxu0 0.0
    %95 = vmatpush2.msra.mxu0 0.0
    %96 = vmatprep.subr.mxu0 0.0
    %97 = vmatpush2.msra.mxu0 0.0
    %98 = vmatprep.mubr.f32.mxu0 0.0
    %99 = vmatmul.mubr.f32.gmra.mxu0 %v32
    %v100 = vpop.f32.mrf.mxu0
    %v101 = vadd.f32 %v28, %v100
    %v102 = vpop.f32.mrf.mxu0
    %103 = vdwg.mxu0
    %v104 = vsel %vm30, %v101, 0.0
    %105 = vadd.xlane.f32.xlu0 %v104
    %v106 = vpop.xlane.xlu0 %105
    %v107 = vrcp.pop 8.0
    %v108 = vmul.f32 %v106, %v107
    %v109 = vsub.f32 %v101, %v108
    %v110 = vmul.f32 %v109, %v109
    %v111 = vsel %vm30, %v110, 0.0
    %112 = vadd.xlane.f32.xlu0 %v111
    %v113 = vpop.xlane.xlu0 %112
    %v114 = vmul.f32 %v113, %v107
    %v115 = vadd.f32 %v114, 1e-05
    %v116 = vrsqrt.pop %v115
    %v117 = vmul.f32 %v109, %v116
    %v118 = vmax.f32 %v117, 0.0
    %v119 = vld [vmem:[%s3] sm:$0xff]
    %121 = vset.pattern.permute.xlu0 0
    %122 = vperm.xlu0 %121, %v119
    %v123 = vpop.permute.xlu0 %122
    %v125 = vmul.f32 %v118, %v123
    %v126 = vsel %vm30, %v125, 0.0
    %v127 = vrot.slane %v126, 4
    %v128 = vadd.f32 %v126, %v127
    %v129 = vrot.slane %v128, 2
    %v130 = vadd.f32 %v128, %v129
    %v131 = vrot.slane %v130, 1
    %v132 = vadd.f32 %v130, %v131
    %s133 = sld [smem:[#allocation2]]
    %v134 = vstv %s133
    %v135 = vadd.f32 %v132, %v134
    %v136 = vxor.u32 %v135, 2147483648
    %v137 = vmul.f32 %v136, 1.442695
    %v138 = vpow.pop %v137
    %v139 = vadd.f32 %v138, 1.0
    %v140 = vrcp.pop %v139
    %v141 = vmul.f32 1.0, %v140
    %vm142 = vcmask 57344
    %143 = vst.msk [vmem:[#allocation3] sm:$0x1] %vm142, %v141
    // Predicated region
    $region22: #{forward_pallas.1} parent=1 // pred_check
      _
    $region23: #{forward_pallas.1} parent=1 // pred_check_branch
      %145 = sbr.rel (0) target = $region25
    $region24: #{forward_pallas.1} parent=1 // pred_region
      %s147 = ssub.s32 16, 16
      %148 = vsyncadd [#allocation4], %s147
      %s150 = sshll.u32 [#allocation3], 4
      %s151 = int_to_ptr.vmem [resolvable:$true] %s150
      %153 = dma.vmem_to_hbm [thread:$0]  %s151, 16, %s5, [#allocation4]
    $region25: #{forward_pallas.1} parent=1 // pred_fallthru
      _
    // Predicated region
    $region26: #{forward_pallas.1} parent=1 // pred_check
      _
    $region27: #{forward_pallas.1} parent=1 // pred_check_branch
      %155 = sbr.rel (0) target = $region29
    $region28: #{forward_pallas.1} parent=1 // pred_region
      %156 = dma.done [#allocation4], 16
    $region29: #{forward_pallas.1} parent=1 // pred_fallthru
      _
    %157 = vsyncpa [#allocation4], 1

</llo_original>
